<compile_context>
chip_gen: v7x
topology: tpu7x:2x2x1
jax: 0.10.0
libtpu: 0.0.40
codegen_flags: <defaults>
</compile_context>

<pallas_src>
import functools

import jax
import jax.numpy as jnp
from jax.experimental import pallas as pl
from jax.experimental.pallas import tpu as pltpu


# --------------------------------------------------------------------------------------
# Pass 1: RMSNorm + K/V projections (each row computed exactly once).
# --------------------------------------------------------------------------------------
def _kv_proj_kernel(x_ref, ln1_ref, wk_ref, wv_ref, k_ref, v_ref, *, eps):
    x = x_ref[0]                                           # (TQ, D) f32
    ms = jnp.mean(x * x, axis=-1, keepdims=True)
    h = (x * jax.lax.rsqrt(ms + eps) * ln1_ref[...]).astype(wk_ref.dtype)
    k_ref[0] = jnp.dot(h, wk_ref[...],
                       preferred_element_type=jnp.float32).astype(k_ref.dtype)
    v_ref[0] = jnp.dot(h, wv_ref[...],
                       preferred_element_type=jnp.float32).astype(v_ref.dtype)


# --------------------------------------------------------------------------------------
# Pass 2: Q projection + causal flash attention + output proj + residual + RMSNorm + FFN.
# --------------------------------------------------------------------------------------
def _attn_ffn_kernel(x_ref, k_ref, v_ref, ln1_ref, wq_ref, wo_ref, ln2_ref,
                     w1_ref, w2_ref, out_ref, attn_acc,
                     *, num_heads, q_tile, kv_tile, eps):
    D = x_ref.shape[2]
    H = num_heads
    dk = D // H
    TQ = q_tile
    TK = kv_tile
    r = TQ // TK                          # diagonal-band KV tiles per query tile (static)
    cdt = k_ref.dtype                     # MXU operand dtype (f32 or bf16); acc is f32

    qi = pl.program_id(1)
    q_start = pl.multiple_of(qi * TQ, TQ)

    def rmsnorm(v, w):                    # rsqrt -> EUP slot, not sqrt + divide on VALU
        ms = jnp.mean(v * v, axis=-1, keepdims=True)
        return v * jax.lax.rsqrt(ms + eps) * w

    x_q = x_ref[0]                                         # (TQ, D) f32 query-tile rows
    h1 = rmsnorm(x_q, ln1_ref[...])
    # Q projection for this tile only; 1/sqrt(dk) is already folded into wq on the host.
    q_all = jnp.dot(h1.astype(cdt), wq_ref[...],
                    preferred_element_type=jnp.float32).astype(cdt)    # (TQ, D)

    # Local iotas for the diagonal-band causal mask (only (TQ, TK), built once).
    row = jax.lax.broadcasted_iota(jnp.int32, (TQ, TK), 0)
    col = jax.lax.broadcasted_iota(jnp.int32, (TQ, TK), 1)
    dims = (((1,), (1,)), ((), ()))       # contract the dk axis of both operands
    NEG = jnp.float32(-1e30)              # finite => no NaN even for a fully-masked row

    for h in range(H):                    # static unroll; lane slices, no (H,.,.) restack
        lo, hi = h * dk, (h + 1) * dk
        q_h = q_all[:, lo:hi]             # (TQ, dk)

        def kv_step(kv_start, carry, masked):
            m_p, l_p, a_p = carry
            k_t = k_ref[0, pl.ds(kv_start, TK), lo:hi]     # (TK, dk) direct lane slice
            v_t = v_ref[0, pl.ds(kv_start, TK), lo:hi]
            s = jax.lax.dot_general(q_h, k_t, dims,
                                    preferred_element_type=jnp.float32)   # (TQ, TK)
            if masked:                    # only the diagonal band pays for the iota mask
                s = jnp.where(kv_start + col > q_start + row, NEG, s)
            m_n = jnp.maximum(m_p, jnp.max(s, axis=-1, keepdims=True))
            alpha = jnp.exp(m_p - m_n)
            p = jnp.exp(s - m_n)
            l_n = alpha * l_p + jnp.sum(p, axis=-1, keepdims=True)
            # bf16 path: p is cast to bf16 for the PV matmul; accumulation stays f32
            # (dominant source of the bf16-path error, acceptable at 5e-2 tolerance).
            a_n = alpha * a_p + jnp.dot(p.astype(cdt), v_t,
                                        preferred_element_type=jnp.float32)
            return m_n, l_n, a_n

        carry = (jnp.full((TQ, 1), NEG, jnp.float32),
                 jnp.zeros((TQ, 1), jnp.float32),
                 jnp.zeros((TQ, dk), jnp.float32))
        # KV tiles strictly below the diagonal: no mask needed; tiles fully above the
        # diagonal are skipped entirely by the loop bound (causal tile skipping).
        carry = jax.lax.fori_loop(
            0, qi * r,
            lambda t, c: kv_step(pl.multiple_of(t * TK, TK), c, masked=False),
            carry)
        # Diagonal band: r static tiles, masked.
        for j in range(r):
            carry = kv_step(pl.multiple_of(q_start + j * TK, TK), carry, masked=True)

        _, l_f, a_f = carry
        # Softmax denominator on the EUP reciprocal slot; write this head's output into
        # the (TQ, D) scratch via a static lane slice (no concat, no per-head matmul).
        attn_acc[:, lo:hi] = a_f * pl.reciprocal(l_f, approx=True)

    # Output projection: a single full-D MXU contraction against the original Wo^T.
    attn = jnp.dot(attn_acc[...].astype(cdt), wo_ref[...],
                   preferred_element_type=jnp.float32)                 # (TQ, D)

    x1 = x_q + attn                       # residual 1 (residual_pdrop=None => identity)
    h2 = rmsnorm(x1, ln2_ref[...])

    # FFN with exact erf-GELU.
    # TODO(synk): for d_ff >= 8k on v7x, chunk w1/w2 over d_ff (inner pipeline) so the FFN
    #             weights and the (TQ, d_ff) intermediate need not be fully resident.
    f = jnp.dot(h2.astype(cdt), w1_ref[...], preferred_element_type=jnp.float32)
    f = f * 0.5 * (1.0 + jax.lax.erf(f * 0.7071067811865476))
    y = jnp.dot(f.astype(cdt), w2_ref[...], preferred_element_type=jnp.float32)

    out_ref[0] = (x1 + y).astype(out_ref.dtype)


# --------------------------------------------------------------------------------------
# Host-side wrapper.
# --------------------------------------------------------------------------------------
def _vmem_limit(resident_bytes):
    """Explicit VMEM budget derived from the resident set (25% + 4 MiB margin)."""
    try:
        cap = pltpu.get_tpu_info().vmem_capacity_bytes
    except Exception:
        cap = 64 * 1024 * 1024
    want = int(resident_bytes * 1.25) + (4 << 20)
    return int(min(max(want, 32 << 20), int(cap * 0.9)))


def _forward(x, ln1, ln2, wq_t, wk_t, wv_t, wo_t, w1_t, w2_t, *,
             num_heads, eps, q_tile, kv_tile, matmul_dtype, single_buffer_weights):
    B, S, D = x.shape
    d_ff = w1_t.shape[1]
    ws = jnp.dtype(matmul_dtype).itemsize
    nq = S // q_tile
    wbuf = 1 if single_buffer_weights else 2

    def const_spec(shape):
        imap = lambda b, q: (0,) * len(shape)
        if single_buffer_weights:
            # Constant index maps gain nothing from double buffering.
            return pl.BlockSpec(shape, imap, pipeline_mode=pl.Buffered(1))
        return pl.BlockSpec(shape, imap)

    # ---------------- pass 1: K/V projections ----------------
    kv_resident = (q_tile * D * 4 * 2                # x tile (double buffered)
                   + D * 4 * wbuf                    # ln1
                   + 2 * D * D * ws * wbuf           # wk, wv
                   + 2 * q_tile * D * ws * 2         # k, v output tiles
                   + 2 * q_tile * D * 4)             # in-kernel rmsnorm temporaries
    k, v = pl.pallas_call(
        functools.partial(_kv_proj_kernel, eps=eps),
        out_shape=(jax.ShapeDtypeStruct((B, S, D), matmul_dtype),
                   jax.ShapeDtypeStruct((B, S, D), matmul_dtype)),
        grid=(B, nq),
        in_specs=[
            pl.BlockSpec((1, q_tile, D), lambda b, s: (b, s, 0)),
            const_spec((1, D)),
            const_spec((D, D)),
            const_spec((D, D)),
        ],
        out_specs=(pl.BlockSpec((1, q_tile, D), lambda b, s: (b, s, 0)),
                   pl.BlockSpec((1, q_tile, D), lambda b, s: (b, s, 0))),
        compiler_params=pltpu.CompilerParams(
            dimension_semantics=("parallel", "parallel"),
            vmem_limit_bytes=_vmem_limit(kv_resident)),
    )(x, ln1, wk_t, wv_t)

    # ---------------- pass 2: attention + FFN ----------------
    attn_resident = (q_tile * D * 4 * 2              # x query tile
                     + 2 * S * D * ws * 2            # K, V full-seq blocks (per batch)
                     + 2 * D * 4 * wbuf              # ln1, ln2
                     + 2 * D * D * ws * wbuf         # wq, wo
                     + 2 * D * d_ff * ws * wbuf      # w1, w2
                     + q_tile * D * 4 * 2            # output tile
                     + q_tile * D * 4                # attn scratch
                     + q_tile * D * (4 + ws)         # q_all
                     + 4 * q_tile * kv_tile * 4      # score-tile temporaries
                     + q_tile * d_ff * 4             # FFN intermediate
                     + 2 * q_tile * D * 4)           # x1 / h2 temporaries
    out = pl.pallas_call(
        functools.partial(_attn_ffn_kernel, num_heads=num_heads,
                          q_tile=q_tile, kv_tile=kv_tile, eps=eps),
        out_shape=jax.ShapeDtypeStruct((B, S, D), x.dtype),
        grid=(B, nq),
        in_specs=[
            pl.BlockSpec((1, q_tile, D), lambda b, q: (b, q, 0)),   # x: query tile only
            pl.BlockSpec((1, S, D), lambda b, q: (b, 0, 0)),        # K (full seq / batch)
            pl.BlockSpec((1, S, D), lambda b, q: (b, 0, 0)),        # V
            const_spec((1, D)),                                     # ln1
            const_spec((D, D)),                                     # wq^T (pre-scaled)
            const_spec((D, D)),                                     # wo^T
            const_spec((1, D)),                                     # ln2
            const_spec((D, d_ff)),                                  # ffn w1^T
            const_spec((d_ff, D)),                                  # ffn w2^T
        ],
        out_specs=pl.BlockSpec((1, q_tile, D), lambda b, q: (b, q, 0)),
        scratch_shapes=[pltpu.VMEM((q_tile, D), jnp.float32)],      # per-head attn buffer
        compiler_params=pltpu.CompilerParams(
            dimension_semantics=("parallel", "parallel"),
            vmem_limit_bytes=_vmem_limit(attn_resident)),
    )(x, k, v, ln1, wq_t, wo_t, ln2, w1_t, w2_t)
    return out


def transformer_block(x, params, *, num_heads, eps=1e-5, q_tile=None, kv_tile=None,
                      matmul_dtype=jnp.float32):
    B, S, D = x.shape
    assert D % num_heads == 0
    dk = D // num_heads

    if q_tile is None:
        q_tile = S if S <= 128 else 128          # 128-aligned q tiles (256 on v6e)
    if kv_tile is None:
        kv_tile = q_tile
    assert S % q_tile == 0 and q_tile % kv_tile == 0 and S % kv_tile == 0

    # One-time host-side weight prep: transpose to (in, out), fold 1/sqrt(dk) into wq,
    # optionally cast matmul weights to bf16 (halves weight VMEM/DMA, full-rate MXU).
    scale = 1.0 / (dk ** 0.5)
    wq_t = (params["wq"].T * scale).astype(matmul_dtype)    # (D, D), pre-scaled
    wk_t = params["wk"].T.astype(matmul_dtype)
    wv_t = params["wv"].T.astype(matmul_dtype)
    wo_t = params["wo"].T.astype(matmul_dtype)              # (D, D) — single full-D matmul
    w1_t = params["w1"].T.astype(matmul_dtype)              # (D, d_ff)
    w2_t = params["w2"].T.astype(matmul_dtype)              # (d_ff, D)
    ln1 = params["ln1"].reshape(1, D).astype(jnp.float32)
    ln2 = params["ln2"].reshape(1, D).astype(jnp.float32)

    args = (x, ln1, ln2, wq_t, wk_t, wv_t, wo_t, w1_t, w2_t)
    kw = dict(num_heads=num_heads, eps=eps, q_tile=q_tile, kv_tile=kv_tile,
              matmul_dtype=matmul_dtype)
    try:
        out = _forward(*args, single_buffer_weights=True, **kw)
        return jax.block_until_ready(out)
    except Exception:
        # Fallback for jax/libtpu builds without pipeline_mode=pl.Buffered support:
        # correctness is unaffected, only the weight VMEM footprint doubles.
        return _forward(*args, single_buffer_weights=False, **kw)


# --------------------------------------------------------------------------------------
# Pure-JAX reference mirroring the PyTorch forward.
# --------------------------------------------------------------------------------------
def _reference(x, params, num_heads, eps=1e-5):
    B, S, D = x.shape
    dk = D // num_heads

    def rms(a, w):
        nf = jnp.sqrt(jnp.mean(a * a, axis=-1, keepdims=True) + eps)
        return a / nf * w

    h = rms(x, params["ln1"])
    Q = (h @ params["wq"].T).reshape(B, S, num_heads, dk).transpose(0, 2, 1, 3)
    K = (h @ params["wk"].T).reshape(B, S, num_heads, dk).transpose(0, 2, 1, 3)
    V = (h @ params["wv"].T).reshape(B, S, num_heads, dk).transpose(0, 2, 1, 3)
    scores = Q @ jnp.swapaxes(K, -2, -1) / jnp.sqrt(jnp.float32(dk))
    mask = jnp.triu(jnp.ones((S, S), dtype=bool), k=1)
    scores = jnp.where(mask, -jnp.inf, scores)
    w = jnp.exp(scores - jnp.max(scores, axis=-1, keepdims=True))
    w = w / jnp.sum(w, axis=-1, keepdims=True)
    attn = (w @ V).transpose(0, 2, 1, 3).reshape(B, S, D) @ params["wo"].T
    x1 = x + attn
    h2 = rms(x1, params["ln2"])
    f = h2 @ params["w1"].T
    f = f * 0.5 * (1.0 + jax.lax.erf(f / jnp.sqrt(jnp.float32(2.0))))
    f = f @ params["w2"].T
    return x1 + f


if __name__ == "__main__":
    key = jax.random.PRNGKey(0)

    def make_params(k, D, DFF):
        kq, kk, kv, ko, k1, k2 = jax.random.split(k, 6)
        return {
            "ln1": jnp.ones((D,), jnp.float32),     # RMSNorm weight init (ones)
            "ln2": jnp.ones((D,), jnp.float32),
            "wq": jax.random.normal(kq, (D, D), jnp.float32) * 0.05,
            "wk": jax.random.normal(kk, (D, D), jnp.float32) * 0.05,
            "wv": jax.random.normal(kv, (D, D), jnp.float32) * 0.05,
            "wo": jax.random.normal(ko, (D, D), jnp.float32) * 0.05,
            "w1": jax.random.normal(k1, (DFF, D), jnp.float32) * 0.05,
            "w2": jax.random.normal(k2, (D, DFF), jnp.float32) * 0.05,
        }

    # Config 1: module-scale smoke test (single q tile), f32 and bf16 MXU operands.
    B, S, D, H, DFF = 2, 8, 32, 4, 64
    kx, kp, key = jax.random.split(key, 3)
    x = jax.random.normal(kx, (B, S, D), dtype=jnp.float32)
    params = make_params(kp, D, DFF)
    ref = _reference(x, params, H)

    out = jax.block_until_ready(transformer_block(x, params, num_heads=H))
    assert out.shape == (B, S, D)
    assert jnp.allclose(out, ref, atol=5e-3, rtol=5e-3), "f32 kernel mismatch (config 1)"

    out_bf16 = jax.block_until_ready(
        transformer_block(x, params, num_heads=H, matmul_dtype=jnp.bfloat16))
    assert jnp.allclose(out_bf16, ref, atol=5e-2, rtol=5e-2), "bf16 kernel mismatch (config 1)"

    # Config 2: multi-tile grid (nq = 4) — exercises the causal KV tile skipping / mask
    # offset math and 128-lane-aligned layouts.
    B2, S2, D2, H2, DFF2 = 2, 32, 128, 4, 256
    kx2, kp2, key = jax.random.split(key, 3)
    x2 = jax.random.normal(kx2, (B2, S2, D2), dtype=jnp.float32)
    params2 = make_params(kp2, D2, DFF2)
    ref2 = _reference(x2, params2, H2)

    out2 = jax.block_until_ready(
        transformer_block(x2, params2, num_heads=H2, q_tile=8, kv_tile=8))
    assert jnp.allclose(out2, ref2, atol=5e-3, rtol=5e-3), "f32 kernel mismatch (config 2)"

    print("KERNEL_OK")
</pallas_src>

<mosaic_0001>
module attributes {stable_mosaic.version = 11 : i64} {
  func.func @_kv_proj_kernel(%arg0: i32, %arg1: i32, %arg2: memref<1x8x32xf32, #tpu.memory_space<vmem>>, %arg3: memref<1x32xf32, #tpu.memory_space<vmem>>, %arg4: memref<32x32xf32, #tpu.memory_space<vmem>>, %arg5: memref<32x32xf32, #tpu.memory_space<vmem>>, %arg6: memref<1x8x32xf32, #tpu.memory_space<vmem>>, %arg7: memref<1x8x32xf32, #tpu.memory_space<vmem>>) attributes {dimension_semantics = [#tpu.dimension_semantics<parallel>, #tpu.dimension_semantics<parallel>], iteration_bounds = array<i64: 2, 1>, scalar_prefetch = 0 : i64, scratch_operands = 0 : i64, tpu.core_type = #tpu.core_type<tc>, window_params = [{transform_indices = @transform_0, window_bounds = array<i64: 1, 8, 32>}, {pipeline_mode = #tpu.pipeline_mode<synchronous>, transform_indices = @transform_1, window_bounds = array<i64: 1, 32>}, {pipeline_mode = #tpu.pipeline_mode<synchronous>, transform_indices = @transform_2, window_bounds = array<i64: 32, 32>}, {pipeline_mode = #tpu.pipeline_mode<synchronous>, transform_indices = @transform_3, window_bounds = array<i64: 32, 32>}, {transform_indices = @transform_4, window_bounds = array<i64: 1, 8, 32>}, {transform_indices = @transform_5, window_bounds = array<i64: 1, 8, 32>}]} {
    %c0 = arith.constant 0 : index
    %c0_0 = arith.constant 0 : index
    %c0_1 = arith.constant 0 : index
    %0 = vector.load %arg2[%c0, %c0_0, %c0_1] : memref<1x8x32xf32, #tpu.memory_space<vmem>>, vector<1x8x32xf32>
    %1 = vector.shape_cast %0 : vector<1x8x32xf32> to vector<8x32xf32>
    %2 = arith.mulf %1, %1 : vector<8x32xf32>
    %cst = arith.constant dense<0.000000e+00> : vector<8xf32>
    %3 = vector.multi_reduction <add>, %2, %cst [1] : vector<8x32xf32> to vector<8xf32>
    %4 = vector.shape_cast %3 : vector<8xf32> to vector<8x1xf32>
    %cst_2 = arith.constant 3.200000e+01 : f32
    %5 = vector.broadcast %cst_2 : f32 to vector<8x1xf32>
    %6 = arith.divf %4, %5 : vector<8x1xf32>
    %cst_3 = arith.constant 9.99999974E-6 : f32
    %7 = vector.broadcast %cst_3 : f32 to vector<8x1xf32>
    %8 = arith.addf %6, %7 : vector<8x1xf32>
    %9 = math.rsqrt %8 : vector<8x1xf32>
    %10 = vector.broadcast %9 : vector<8x1xf32> to vector<8x32xf32>
    %11 = arith.mulf %1, %10 : vector<8x32xf32>
    %c0_4 = arith.constant 0 : index
    %c0_5 = arith.constant 0 : index
    %12 = vector.load %arg3[%c0_4, %c0_5] : memref<1x32xf32, #tpu.memory_space<vmem>>, vector<1x32xf32>
    %13 = vector.broadcast %12 : vector<1x32xf32> to vector<8x32xf32>
    %14 = arith.mulf %11, %13 : vector<8x32xf32>
    %c0_6 = arith.constant 0 : index
    %c0_7 = arith.constant 0 : index
    %15 = vector.load %arg4[%c0_6, %c0_7] : memref<32x32xf32, #tpu.memory_space<vmem>>, vector<32x32xf32>
    %cst_8 = arith.constant dense<0.000000e+00> : vector<8x32xf32>
    %16 = tpu.matmul %14, %15, %cst_8 {dimension_numbers = #tpu.dot_dimension_numbers<[1], [0], [0], [1], [0, 0, 1, 1], [], []>} : vector<8x32xf32>, vector<32x32xf32>, vector<8x32xf32> -> vector<8x32xf32>
    %c0_9 = arith.constant 0 : index
    %c0_10 = arith.constant 0 : index
    %c0_11 = arith.constant 0 : index
    %17 = vector.load %arg6[%c0_9, %c0_10, %c0_11] : memref<1x8x32xf32, #tpu.memory_space<vmem>>, vector<1x8x32xf32>
    %18 = vector.shape_cast %17 : vector<1x8x32xf32> to vector<8x32xf32>
    %19 = vector.shape_cast %16 : vector<8x32xf32> to vector<1x8x32xf32>
    tpu.vector_store %arg6[%c0_9, %c0_10, %c0_11], %19 {strides = array<i32>} : memref<1x8x32xf32, #tpu.memory_space<vmem>>, vector<1x8x32xf32>,
    %c0_12 = arith.constant 0 : index
    %c0_13 = arith.constant 0 : index
    %20 = vector.load %arg5[%c0_12, %c0_13] : memref<32x32xf32, #tpu.memory_space<vmem>>, vector<32x32xf32>
    %cst_14 = arith.constant dense<0.000000e+00> : vector<8x32xf32>
    %21 = tpu.matmul %14, %20, %cst_14 {dimension_numbers = #tpu.dot_dimension_numbers<[1], [0], [0], [1], [0, 0, 1, 1], [], []>} : vector<8x32xf32>, vector<32x32xf32>, vector<8x32xf32> -> vector<8x32xf32>
    %c0_15 = arith.constant 0 : index
    %c0_16 = arith.constant 0 : index
    %c0_17 = arith.constant 0 : index
    %22 = vector.load %arg7[%c0_15, %c0_16, %c0_17] : memref<1x8x32xf32, #tpu.memory_space<vmem>>, vector<1x8x32xf32>
    %23 = vector.shape_cast %22 : vector<1x8x32xf32> to vector<8x32xf32>
    %24 = vector.shape_cast %21 : vector<8x32xf32> to vector<1x8x32xf32>
    tpu.vector_store %arg7[%c0_15, %c0_16, %c0_17], %24 {strides = array<i32>} : memref<1x8x32xf32, #tpu.memory_space<vmem>>, vector<1x8x32xf32>,
    return
  }
  func.func @transform_0(%arg0: i32, %arg1: i32) -> (i32, i32, i32) {
    %c0_i32 = arith.constant 0 : i32
    %c0_i32_0 = arith.constant 0 : i32
    return %arg0, %arg1, %c0_i32 : i32, i32, i32
  }
  func.func @transform_1(%arg0: i32, %arg1: i32) -> (i32, i32) {
    %c0_i32 = arith.constant 0 : i32
    %c0_i32_0 = arith.constant 0 : i32
    %c0_i32_1 = arith.constant 0 : i32
    return %c0_i32, %c0_i32_0 : i32, i32
  }
  func.func @transform_2(%arg0: i32, %arg1: i32) -> (i32, i32) {
    %c0_i32 = arith.constant 0 : i32
    %c0_i32_0 = arith.constant 0 : i32
    %c0_i32_1 = arith.constant 0 : i32
    return %c0_i32, %c0_i32_0 : i32, i32
  }
  func.func @transform_3(%arg0: i32, %arg1: i32) -> (i32, i32) {
    %c0_i32 = arith.constant 0 : i32
    %c0_i32_0 = arith.constant 0 : i32
    %c0_i32_1 = arith.constant 0 : i32
    return %c0_i32, %c0_i32_0 : i32, i32
  }
  func.func @transform_4(%arg0: i32, %arg1: i32) -> (i32, i32, i32) {
    %c0_i32 = arith.constant 0 : i32
    %c0_i32_0 = arith.constant 0 : i32
    return %arg0, %arg1, %c0_i32 : i32, i32, i32
  }
  func.func @transform_5(%arg0: i32, %arg1: i32) -> (i32, i32, i32) {
    %c0_i32 = arith.constant 0 : i32
    %c0_i32_0 = arith.constant 0 : i32
    return %arg0, %arg1, %c0_i32 : i32, i32, i32
  }
}

module attributes {stable_mosaic.version = 11 : i64} {
  func.func @_kv_proj_kernel(%arg0: i32, %arg1: i32, %arg2: memref<1x8x32xf32, #tpu.memory_space<vmem>>, %arg3: memref<1x32xf32, #tpu.memory_space<vmem>>, %arg4: memref<32x32xf32, #tpu.memory_space<vmem>>, %arg5: memref<32x32xf32, #tpu.memory_space<vmem>>, %arg6: memref<1x8x32xf32, #tpu.memory_space<vmem>>, %arg7: memref<1x8x32xf32, #tpu.memory_space<vmem>>) attributes {dimension_semantics = [#tpu.dimension_semantics<parallel>, #tpu.dimension_semantics<parallel>], iteration_bounds = array<i64: 2, 1>, scalar_prefetch = 0 : i64, scratch_operands = 0 : i64, tpu.core_type = #tpu.core_type<tc>, window_params = [{transform_indices = @transform_0, window_bounds = array<i64: 1, 8, 32>}, {pipeline_mode = #tpu.pipeline_mode<synchronous>, transform_indices = @transform_1, window_bounds = array<i64: 1, 32>}, {pipeline_mode = #tpu.pipeline_mode<synchronous>, transform_indices = @transform_2, window_bounds = array<i64: 32, 32>}, {pipeline_mode = #tpu.pipeline_mode<synchronous>, transform_indices = @transform_3, window_bounds = array<i64: 32, 32>}, {transform_indices = @transform_4, window_bounds = array<i64: 1, 8, 32>}, {transform_indices = @transform_5, window_bounds = array<i64: 1, 8, 32>}]} {
    %c0 = arith.constant 0 : index
    %c0_0 = arith.constant 0 : index
    %c0_1 = arith.constant 0 : index
    %0 = vector.load %arg2[%c0, %c0_0, %c0_1] : memref<1x8x32xf32, #tpu.memory_space<vmem>>, vector<1x8x32xf32>
    %1 = vector.shape_cast %0 : vector<1x8x32xf32> to vector<8x32xf32>
    %2 = arith.mulf %1, %1 : vector<8x32xf32>
    %cst = arith.constant dense<0.000000e+00> : vector<8xf32>
    %3 = vector.multi_reduction <add>, %2, %cst [1] : vector<8x32xf32> to vector<8xf32>
    %4 = vector.shape_cast %3 : vector<8xf32> to vector<8x1xf32>
    %cst_2 = arith.constant 3.200000e+01 : f32
    %5 = vector.broadcast %cst_2 : f32 to vector<8x1xf32>
    %6 = arith.divf %4, %5 : vector<8x1xf32>
    %cst_3 = arith.constant 9.99999974E-6 : f32
    %7 = vector.broadcast %cst_3 : f32 to vector<8x1xf32>
    %8 = arith.addf %6, %7 : vector<8x1xf32>
    %9 = math.rsqrt %8 : vector<8x1xf32>
    %10 = vector.broadcast %9 : vector<8x1xf32> to vector<8x32xf32>
    %11 = arith.mulf %1, %10 : vector<8x32xf32>
    %c0_4 = arith.constant 0 : index
    %c0_5 = arith.constant 0 : index
    %12 = vector.load %arg3[%c0_4, %c0_5] : memref<1x32xf32, #tpu.memory_space<vmem>>, vector<1x32xf32>
    %13 = vector.broadcast %12 : vector<1x32xf32> to vector<8x32xf32>
    %14 = arith.mulf %11, %13 : vector<8x32xf32>
    %c0_6 = arith.constant 0 : index
    %c0_7 = arith.constant 0 : index
    %15 = vector.load %arg4[%c0_6, %c0_7] : memref<32x32xf32, #tpu.memory_space<vmem>>, vector<32x32xf32>
    %cst_8 = arith.constant dense<0.000000e+00> : vector<8x32xf32>
    %16 = tpu.matmul %14, %15, %cst_8 {dimension_numbers = #tpu.dot_dimension_numbers<[1], [0], [0], [1], [0, 0, 1, 1], [], []>} : vector<8x32xf32>, vector<32x32xf32>, vector<8x32xf32> -> vector<8x32xf32>
    %c0_9 = arith.constant 0 : index
    %c0_10 = arith.constant 0 : index
    %c0_11 = arith.constant 0 : index
    %17 = vector.load %arg6[%c0_9, %c0_10, %c0_11] : memref<1x8x32xf32, #tpu.memory_space<vmem>>, vector<1x8x32xf32>
    %18 = vector.shape_cast %17 : vector<1x8x32xf32> to vector<8x32xf32>
    %19 = vector.shape_cast %16 : vector<8x32xf32> to vector<1x8x32xf32>
    tpu.vector_store %arg6[%c0_9, %c0_10, %c0_11], %19 {strides = array<i32>} : memref<1x8x32xf32, #tpu.memory_space<vmem>>, vector<1x8x32xf32>,
    %c0_12 = arith.constant 0 : index
    %c0_13 = arith.constant 0 : index
    %20 = vector.load %arg5[%c0_12, %c0_13] : memref<32x32xf32, #tpu.memory_space<vmem>>, vector<32x32xf32>
    %cst_14 = arith.constant dense<0.000000e+00> : vector<8x32xf32>
    %21 = tpu.matmul %14, %20, %cst_14 {dimension_numbers = #tpu.dot_dimension_numbers<[1], [0], [0], [1], [0, 0, 1, 1], [], []>} : vector<8x32xf32>, vector<32x32xf32>, vector<8x32xf32> -> vector<8x32xf32>
    %c0_15 = arith.constant 0 : index
    %c0_16 = arith.constant 0 : index
    %c0_17 = arith.constant 0 : index
    %22 = vector.load %arg7[%c0_15, %c0_16, %c0_17] : memref<1x8x32xf32, #tpu.memory_space<vmem>>, vector<1x8x32xf32>
    %23 = vector.shape_cast %22 : vector<1x8x32xf32> to vector<8x32xf32>
    %24 = vector.shape_cast %21 : vector<8x32xf32> to vector<1x8x32xf32>
    tpu.vector_store %arg7[%c0_15, %c0_16, %c0_17], %24 {strides = array<i32>} : memref<1x8x32xf32, #tpu.memory_space<vmem>>, vector<1x8x32xf32>,
    return
  }
  func.func @transform_0(%arg0: i32, %arg1: i32) -> (i32, i32, i32) {
    %c0_i32 = arith.constant 0 : i32
    %c0_i32_0 = arith.constant 0 : i32
    return %arg0, %arg1, %c0_i32 : i32, i32, i32
  }
  func.func @transform_1(%arg0: i32, %arg1: i32) -> (i32, i32) {
    %c0_i32 = arith.constant 0 : i32
    %c0_i32_0 = arith.constant 0 : i32
    %c0_i32_1 = arith.constant 0 : i32
    return %c0_i32, %c0_i32_0 : i32, i32
  }
  func.func @transform_2(%arg0: i32, %arg1: i32) -> (i32, i32) {
    %c0_i32 = arith.constant 0 : i32
    %c0_i32_0 = arith.constant 0 : i32
    %c0_i32_1 = arith.constant 0 : i32
    return %c0_i32, %c0_i32_0 : i32, i32
  }
  func.func @transform_3(%arg0: i32, %arg1: i32) -> (i32, i32) {
    %c0_i32 = arith.constant 0 : i32
    %c0_i32_0 = arith.constant 0 : i32
    %c0_i32_1 = arith.constant 0 : i32
    return %c0_i32, %c0_i32_0 : i32, i32
  }
  func.func @transform_4(%arg0: i32, %arg1: i32) -> (i32, i32, i32) {
    %c0_i32 = arith.constant 0 : i32
    %c0_i32_0 = arith.constant 0 : i32
    return %arg0, %arg1, %c0_i32 : i32, i32, i32
  }
  func.func @transform_5(%arg0: i32, %arg1: i32) -> (i32, i32, i32) {
    %c0_i32 = arith.constant 0 : i32
    %c0_i32_0 = arith.constant 0 : i32
    return %arg0, %arg1, %c0_i32 : i32, i32, i32
  }
}

</mosaic_0001>

<llo_original>
// kernel: tpu_custom_call.1
$region0: #{tpu_custom_call.1}
  #allocation0 [shape = 'u32[]', space=smem, size = 0x4, offset = 0x4, fixed_abs, tag = 'smem constant byte address 0x4 - core index']
  #allocation1 [shape = 'u32[144,128]{1,0:T(1,128)}', space=vmem, size = 0x12000, scoped, tag = 'internal scratch']
  %s0 = inlined_call_operand.hbm [shape: f32[2,8,32], index: 0, kind: input, shape index: {}]
  %s1 = inlined_call_operand.vmem [shape: f32[1,32], index: 1, kind: input, shape index: {}]
  %s2 = inlined_call_operand.hbm [shape: f32[32,32], index: 2, kind: input, shape index: {}]
  %s3 = inlined_call_operand.hbm [shape: f32[32,32], index: 3, kind: input, shape index: {}]
  %s4 = inlined_call_operand.hbm [shape: f32[2,8,32], index: 4, kind: output, shape index: {0}]
  %s5 = inlined_call_operand.hbm [shape: f32[2,8,32], index: 5, kind: output, shape index: {1}]
  %6 = xla_tuple %s4, %s5
  %s7 = sld [smem:[#allocation0]]
  $region69: #{tpu_custom_call.1} parent=0
    _
  %s9 = ssub.s32 1, %s7
  %s10 = scalar_select 0, %s9, %s7
  $region1: #{tpu_custom_call.1} parent=0
    #allocation2 [shape = 'u8[8192]{0}', space=vmem, size = 0x2000, scoped, tag = 'input window, operand 0']
    #allocation3 [shape = 's32[2]{0}', space=sflag, size = 0x8, scoped, tag = 'scoped memory for tpu_custom_call.1']
    #allocation4 [shape = 's32[2]{0}', space=sflag, size = 0x8, scoped, tag = 'scoped memory for tpu_custom_call.1']
    #allocation5 [shape = 'u8[16384]{0}', space=vmem, size = 0x4000, scoped, tag = 'input window, operand 2, single buffered']
    #allocation6 [shape = 's32[1]{0}', space=sflag, size = 0x4, scoped, tag = 'scoped memory for tpu_custom_call.1']
    #allocation7 [shape = 'u8[16384]{0}', space=vmem, size = 0x4000, scoped, tag = 'input window, operand 3, single buffered']
    #allocation8 [shape = 'u8[8192]{0}', space=vmem, size = 0x2000, scoped, tag = 'output window, operand 0']
    #allocation9 [shape = 'u8[8192]{0}', space=vmem, size = 0x2000, scoped, tag = 'output window, operand 1']
    #allocation10 [shape = 's32[2]{0}', space=sflag, size = 0x8, scoped, tag = 'scoped memory for tpu_custom_call.1']
    %11 = vsyncpa [#allocation3], 0
    %s12 = scalar_lea.sflag [#allocation3], 1
    %13 = vsyncpa %s12, 0
    %14 = vsyncpa [#allocation6], 0
    %15 = vsyncpa [#allocation4], 0
    %s16 = scalar_lea.sflag [#allocation4], 1
    %17 = vsyncpa %s16, 0
    %18 = vsyncpa [#allocation10], 0
    %s19 = scalar_lea.sflag [#allocation10], 1
    %20 = vsyncpa %s19, 0
    loop: start=0, step=1, limit=4
    $region2: #{tpu_custom_call.1} parent=1 // loop_pre_header
      _
    $region3: #{tpu_custom_call.1} parent=1 // loop_header
      %s22 = sphi 0, %s26
      %p23 = scmp.ge.s32.totalorder %s22, 4
      %s29 = sphi 0, %s41
      %s30 = sphi 0, %s37
      %s31 = sphi 0, %s29
      %s32 = sphi 0, %s30
      %s33 = sphi 0, %s31
      %s34 = sphi 0, %s32
      %s46 = sphi 0, %s48
      %s49 = sphi 0, %s46
      %s50 = sphi 0, %s49
      %s66 = sphi 0, %s50
      %s70 = sphi 0, %s70
      %s72 = sphi 0, %s70
      %s73 = sphi 0, %s72
      %s87 = sphi 0, %s73
      %s91 = sphi 0, %s91
      %s93 = sphi 0, %s91
      %s94 = sphi 0, %s93
      %s108 = sphi 0, %s94
      %s112 = sphi 0, %s112
      %s114 = sphi 0, %s112
      %s115 = sphi 0, %s114
      %s129 = sphi 0, %s115
      %s137 = sphi 0, %s139
      %s140 = sphi 0, %s137
      %s141 = sphi 0, %s140
      %s157 = sphi 0, %s141
      %s165 = sphi 0, %s167
      %s168 = sphi 0, %s165
      %s169 = sphi 0, %s168
      %s185 = sphi 0, %s169
    $region4: #{tpu_custom_call.1} parent=1 // loop_header_branch
      %25 = sbr.rel (%p23) target = $region8
    $region5: #{tpu_custom_call.1} parent=1 // loop_body
      %s27 = ssub.s32 %s22, 1
      %s28 = ssub.s32 %s22, 2
      %s35 = sadd.s32 1, %s30
      %p36 = scmp.ge.s32.totalorder %s35, 1
      %s37 = scalar_select %p36, 0, %s35
      %s38 = sadd.s32 1, %s29
      %s39 = scalar_select %p36, %s38, %s29
      %p40 = scmp.ge.s32.totalorder %s39, 2
      %s41 = scalar_select %p40, 0, %s39
      %s42 = ssub.s32 %s29, %s41
      %s43 = ssub.s32 %s30, %s37
      %s44 = sor.u32 %s42, %s43
      %p45 = scmp.eq.s32.totalorder %s44, 0
      %s47 = sadd.s32 %s46, 1
      %s48 = scalar_select %p45, %s46, %s47
      %p51 = pneg %p45
      %p52 = scmp.eq.s32.totalorder %s22, 1
      %p53 = por %p51, %p52
      %p54 = scmp.ne.s32.totalorder %s46, %s49
      %p55 = scmp.eq.s32.totalorder %s22, 0
      %p56 = por %p54, %p55
      %p57 = scmp.ne.s32.totalorder %s46, %s49
      %p58 = scmp.eq.s32.totalorder %s27, 1
      %p59 = por %p57, %p58
      %p60 = scmp.ne.s32.totalorder %s49, %s50
      %p61 = scmp.eq.s32.totalorder %s27, 0
      %p62 = por %p60, %p61
      %p63 = scmp.ne.s32.totalorder %s49, %s50
      %p64 = scmp.eq.s32.totalorder %s28, 1
      %p65 = por %p63, %p64
      %p67 = scmp.ne.s32.totalorder %s50, %s66
      %p68 = scmp.eq.s32.totalorder %s28, 0
      %p69 = por %p67, %p68
      %s71 = sadd.s32 %s70, 1
      %p74 = scmp.eq.s32.totalorder %s22, 1
      %p75 = scmp.ne.s32.totalorder %s70, %s72
      %p76 = scmp.eq.s32.totalorder %s22, 0
      %p77 = por %p75, %p76
      %p78 = scmp.ne.s32.totalorder %s70, %s72
      %p79 = scmp.eq.s32.totalorder %s27, 1
      %p80 = por %p78, %p79
      %p81 = scmp.ne.s32.totalorder %s72, %s73
      %p82 = scmp.eq.s32.totalorder %s27, 0
      %p83 = por %p81, %p82
      %p84 = scmp.ne.s32.totalorder %s72, %s73
      %p85 = scmp.eq.s32.totalorder %s28, 1
      %p86 = por %p84, %p85
      %p88 = scmp.ne.s32.totalorder %s73, %s87
      %p89 = scmp.eq.s32.totalorder %s28, 0
      %p90 = por %p88, %p89
      %s92 = sadd.s32 %s91, 1
      %p95 = scmp.eq.s32.totalorder %s22, 1
      %p96 = scmp.ne.s32.totalorder %s91, %s93
      %p97 = scmp.eq.s32.totalorder %s22, 0
      %p98 = por %p96, %p97
      %p99 = scmp.ne.s32.totalorder %s91, %s93
      %p100 = scmp.eq.s32.totalorder %s27, 1
      %p101 = por %p99, %p100
      %p102 = scmp.ne.s32.totalorder %s93, %s94
      %p103 = scmp.eq.s32.totalorder %s27, 0
      %p104 = por %p102, %p103
      %p105 = scmp.ne.s32.totalorder %s93, %s94
      %p106 = scmp.eq.s32.totalorder %s28, 1
      %p107 = por %p105, %p106
      %p109 = scmp.ne.s32.totalorder %s94, %s108
      %p110 = scmp.eq.s32.totalorder %s28, 0
      %p111 = por %p109, %p110
      %s113 = sadd.s32 %s112, 1
      %p116 = scmp.eq.s32.totalorder %s22, 1
      %p117 = scmp.ne.s32.totalorder %s112, %s114
      %p118 = scmp.eq.s32.totalorder %s22, 0
      %p119 = por %p117, %p118
      %p120 = scmp.ne.s32.totalorder %s112, %s114
      %p121 = scmp.eq.s32.totalorder %s27, 1
      %p122 = por %p120, %p121
      %p123 = scmp.ne.s32.totalorder %s114, %s115
      %p124 = scmp.eq.s32.totalorder %s27, 0
      %p125 = por %p123, %p124
      %p126 = scmp.ne.s32.totalorder %s114, %s115
      %p127 = scmp.eq.s32.totalorder %s28, 1
      %p128 = por %p126, %p127
      %p130 = scmp.ne.s32.totalorder %s115, %s129
      %p131 = scmp.eq.s32.totalorder %s28, 0
      %p132 = por %p130, %p131
      %s133 = ssub.s32 %s29, %s41
      %s134 = ssub.s32 %s30, %s37
      %s135 = sor.u32 %s133, %s134
      %p136 = scmp.eq.s32.totalorder %s135, 0
      %s138 = sadd.s32 %s137, 1
      %s139 = scalar_select %p136, %s137, %s138
      %p142 = pneg %p136
      %p143 = scmp.eq.s32.totalorder %s22, 1
      %p144 = por %p142, %p143
      %p145 = scmp.ne.s32.totalorder %s137, %s140
      %p146 = scmp.eq.s32.totalorder %s22, 0
      %p147 = por %p145, %p146
      %p148 = scmp.ne.s32.totalorder %s137, %s140
      %p149 = scmp.eq.s32.totalorder %s27, 1
      %p150 = por %p148, %p149
      %p151 = scmp.ne.s32.totalorder %s140, %s141
      %p152 = scmp.eq.s32.totalorder %s27, 0
      %p153 = por %p151, %p152
      %p154 = scmp.ne.s32.totalorder %s140, %s141
      %p155 = scmp.eq.s32.totalorder %s28, 1
      %p156 = por %p154, %p155
      %p158 = scmp.ne.s32.totalorder %s141, %s157
      %p159 = scmp.eq.s32.totalorder %s28, 0
      %p160 = por %p158, %p159
      %s161 = ssub.s32 %s29, %s41
      %s162 = ssub.s32 %s30, %s37
      %s163 = sor.u32 %s161, %s162
      %p164 = scmp.eq.s32.totalorder %s163, 0
      %s166 = sadd.s32 %s165, 1
      %s167 = scalar_select %p164, %s165, %s166
      %p170 = pneg %p164
      %p171 = scmp.eq.s32.totalorder %s22, 1
      %p172 = por %p170, %p171
      %p173 = scmp.ne.s32.totalorder %s165, %s168
      %p174 = scmp.eq.s32.totalorder %s22, 0
      %p175 = por %p173, %p174
      %p176 = scmp.ne.s32.totalorder %s165, %s168
      %p177 = scmp.eq.s32.totalorder %s27, 1
      %p178 = por %p176, %p177
      %p179 = scmp.ne.s32.totalorder %s168, %s169
      %p180 = scmp.eq.s32.totalorder %s27, 0
      %p181 = por %p179, %p180
      %p182 = scmp.ne.s32.totalorder %s168, %s169
      %p183 = scmp.eq.s32.totalorder %s28, 1
      %p184 = por %p182, %p183
      %p186 = scmp.ne.s32.totalorder %s169, %s185
      %p187 = scmp.eq.s32.totalorder %s28, 0
      %p188 = por %p186, %p187
      %p189 = scmp.le.s32.totalorder 1, %s22
      %p190 = scmp.lt.s32.totalorder %s22, 3
      %p191 = pnand %p189, %p190
      %p192 = pneg %p191
      // Predicated region
      $region9: #{tpu_custom_call.1} parent=5 // pred_check
        _
      $region10: #{tpu_custom_call.1} parent=5 // pred_check_branch
        %194 = sbr.rel (%p191) target = $region12
      $region11: #{tpu_custom_call.1} parent=5 // pred_region
        %s195 = ssub.s32 %s22, 1
        // Predicated region
        $region13: #{tpu_custom_call.1} parent=11 // pred_check
          %p196 = pneg %p83
        $region14: #{tpu_custom_call.1} parent=11 // pred_check_branch
          %198 = sbr.rel (%p196) target = $region16
        $region15: #{tpu_custom_call.1} parent=11 // pred_region
          _
        $region16: #{tpu_custom_call.1} parent=11 // pred_fallthru
          _
        // Predicated region
        $region17: #{tpu_custom_call.1} parent=11 // pred_check
          %p199 = pneg %p104
        $region18: #{tpu_custom_call.1} parent=11 // pred_check_branch
          %201 = sbr.rel (%p199) target = $region20
        $region19: #{tpu_custom_call.1} parent=11 // pred_region
          %s203 = ssub.s32 512, 512
          %204 = vsyncadd [#allocation6], %s203
          %s205 = sshll.u32 [#allocation5], 4
          %s206 = int_to_ptr.vmem [resolvable:$true] %s205
          %211 = dma.hbm_to_vmem [thread:$0]  %s2, 512, %s206, [#allocation6], 128, 128, 8
        $region20: #{tpu_custom_call.1} parent=11 // pred_fallthru
          _
        // Predicated region
        $region21: #{tpu_custom_call.1} parent=11 // pred_check
          %p212 = pneg %p125
        $region22: #{tpu_custom_call.1} parent=11 // pred_check_branch
          %214 = sbr.rel (%p212) target = $region24
        $region23: #{tpu_custom_call.1} parent=11 // pred_region
          %s216 = ssub.s32 512, 512
          %217 = vsyncadd [#allocation6], %s216
          %s218 = sshll.u32 [#allocation7], 4
          %s219 = int_to_ptr.vmem [resolvable:$true] %s218
          %224 = dma.hbm_to_vmem [thread:$0]  %s3, 512, %s219, [#allocation6], 128, 128, 8
        $region24: #{tpu_custom_call.1} parent=11 // pred_fallthru
          _
      $region12: #{tpu_custom_call.1} parent=5 // pred_fallthru
        _
      %p225 = scmp.lt.s32.totalorder %s22, 2
      // Predicated region
      $region25: #{tpu_custom_call.1} parent=5 // pred_check
        %p226 = pneg %p225
      $region26: #{tpu_custom_call.1} parent=5 // pred_check_branch
        %228 = sbr.rel (%p226) target = $region28
      $region27: #{tpu_custom_call.1} parent=5 // pred_region
        // Predicated region
        $region29: #{tpu_custom_call.1} parent=27 // pred_check
          %p229 = pneg %p56
        $region30: #{tpu_custom_call.1} parent=27 // pred_check_branch
          %231 = sbr.rel (%p229) target = $region32
        $region31: #{tpu_custom_call.1} parent=27 // pred_region
          %s232 = sand.u32 %s46, 1
          %s233 = scalar_lea.sflag [#allocation3], %s232
          %s234 = sand.u32 %s46, 1
          %s235 = smul.addr %s234, 8
          %s236 = scalar_lea.vmem [#allocation2], %s235
          %s238 = ssub.s32 128, 128
          %239 = vsyncadd %s233, %s238
          %s240 = sadd.s32 %s30, %s29
          %s241 = smul.addr %s240, 128
          %s242 = scalar_lea.hbm %s0, %s241
          %s244 = sshll.u32 %s236, 4
          %s245 = int_to_ptr.vmem [resolvable:$true] %s244
          %247 = dma.hbm_to_vmem [thread:$0]  %s242, 128, %s245, %s233
        $region32: #{tpu_custom_call.1} parent=27 // pred_fallthru
          _
      $region28: #{tpu_custom_call.1} parent=5 // pred_fallthru
        _
      %p248 = scmp.le.s32.totalorder 1, %s22
      %p249 = scmp.lt.s32.totalorder %s22, 3
      %p250 = pnand %p248, %p249
      %p251 = pneg %p250
      // Predicated region
      $region33: #{tpu_custom_call.1} parent=5 // pred_check
        _
      $region34: #{tpu_custom_call.1} parent=5 // pred_check_branch
        %253 = sbr.rel (%p250) target = $region36
      $region35: #{tpu_custom_call.1} parent=5 // pred_region
        %s254 = ssub.s32 %s22, 1
        %s255 = sand.u32 %s49, 1
        %s256 = scalar_lea.sflag [#allocation3], %s255
        %s257 = sand.u32 %s49, 1
        %s258 = smul.addr %s257, 8
        %s259 = scalar_lea.vmem [#allocation2], %s258
        // Predicated region
        $region37: #{tpu_custom_call.1} parent=35 // pred_check
          %p260 = pneg %p62
        $region38: #{tpu_custom_call.1} parent=35 // pred_check_branch
          %262 = sbr.rel (%p260) target = $region40
        $region39: #{tpu_custom_call.1} parent=35 // pred_region
          %263 = dma.done %s256, 128
        $region40: #{tpu_custom_call.1} parent=35 // pred_fallthru
          _
        // Predicated region
        $region41: #{tpu_custom_call.1} parent=35 // pred_check
          %p264 = pneg %p104
        $region42: #{tpu_custom_call.1} parent=35 // pred_check_branch
          %266 = sbr.rel (%p264) target = $region44
        $region43: #{tpu_custom_call.1} parent=35 // pred_region
          %267 = dma.done [#allocation6], 512
        $region44: #{tpu_custom_call.1} parent=35 // pred_fallthru
          _
        // Predicated region
        $region45: #{tpu_custom_call.1} parent=35 // pred_check
          %p268 = pneg %p125
        $region46: #{tpu_custom_call.1} parent=35 // pred_check_branch
          %270 = sbr.rel (%p268) target = $region48
        $region47: #{tpu_custom_call.1} parent=35 // pred_region
          %271 = dma.done [#allocation6], 512
        $region48: #{tpu_custom_call.1} parent=35 // pred_fallthru
          _
        %s272 = sand.u32 %s49, 1
        %s273 = scalar_lea.sflag [#allocation3], %s272
        %s274 = sand.u32 %s49, 1
        %s275 = smul.addr %s274, 8
        %s276 = scalar_lea.vmem [#allocation2], %s275
        %p277 = pneg %p62
        %p278 = pneg %p59
        %p279 = pneg %p83
        %p280 = pneg %p80
        %p281 = pneg %p104
        %p282 = pneg %p101
        %p283 = pneg %p125
        %p284 = pneg %p122
        %p285 = pneg %p153
        %p286 = pneg %p150
        %s287 = sand.u32 %s140, 1
        %s288 = scalar_lea.sflag [#allocation4], %s287
        %s289 = sand.u32 %s140, 1
        %s290 = smul.addr %s289, 8
        %s291 = scalar_lea.vmem [#allocation8], %s290
        %p292 = pneg %p181
        %p293 = pneg %p178
        %s294 = sand.u32 %s168, 1
        %s295 = scalar_lea.sflag [#allocation10], %s294
        %s296 = sand.u32 %s168, 1
        %s297 = smul.addr %s296, 8
        %s298 = scalar_lea.vmem [#allocation9], %s297
        %v299 = vld [vmem:[%s259] sm:$0xff]
        %v300 = vmul.f32 %v299, %v299
        %vm301 = vcmask 261120
        %v302 = vsel %vm301, %v300, 0.0
        %303 = vadd.xlane.f32.xlu0 %v302
        %v304 = vpop.xlane.xlu0 %303
        %v305 = vrcp.pop 32.0
        %v306 = vmul.f32 %v304, %v305
        %v307 = vadd.f32 %v306, 1e-05
        %v308 = vrsqrt.pop %v307
        %v309 = vmul.f32 %v299, %v308
        %v310 = vld [vmem:[%s1] sm:$0x1]
        %v312 = vlaneseq
        %v313 = vshrl.u32 %v312, 7
        %v314 = vsub.s32 0, %v313
        %v315 = vrot.slane %v310, %v314
        %v317 = vmul.f32 %v309, %v315
        %v318 = vld [vmem:[#allocation5] sm:$0xff]
        %v319 = vld [vmem:[#allocation5 + $0x8] sm:$0xff]
        %v320 = vld [vmem:[#allocation5 + $0x10] sm:$0xff]
        %v321 = vld [vmem:[#allocation5 + $0x18] sm:$0xff]
        %v323 = vsel %vm301, %v317, 0
        %325 = vmatprep.subr.mxu0 0.0
        %326 = vmatpush1.msra.mxu0 %v318
        %327 = vmatprep.subr.mxu0 0.0
        %328 = vmatpush1.msra.mxu0 %v319
        %329 = vmatprep.subr.mxu0 0.0
        %330 = vmatpush1.msra.mxu0 %v320
        %331 = vmatprep.subr.mxu0 0.0
        %332 = vmatpush1.msra.mxu0 %v321
        %333 = vmatprep.subr.mxu0 0.0
        %334 = vmatpush1.msra.mxu0 0.0
        %335 = vmatprep.subr.mxu0 0.0
        %336 = vmatpush1.msra.mxu0 0.0
        %337 = vmatprep.subr.mxu0 0.0
        %338 = vmatpush1.msra.mxu0 0.0
        %339 = vmatprep.subr.mxu0 0.0
        %340 = vmatpush1.msra.mxu0 0.0
        %341 = vmatprep.subr.mxu0 0.0
        %342 = vmatpush1.msra.mxu0 0.0
        %343 = vmatprep.subr.mxu0 0.0
        %344 = vmatpush1.msra.mxu0 0.0
        %345 = vmatprep.subr.mxu0 0.0
        %346 = vmatpush1.msra.mxu0 0.0
        %347 = vmatprep.subr.mxu0 0.0
        %348 = vmatpush1.msra.mxu0 0.0
        %349 = vmatprep.subr.mxu0 0.0
        %350 = vmatpush1.msra.mxu0 0.0
        %351 = vmatprep.subr.mxu0 0.0
        %352 = vmatpush1.msra.mxu0 0.0
        %353 = vmatprep.subr.mxu0 0.0
        %354 = vmatpush1.msra.mxu0 0.0
        %355 = vmatprep.subr.mxu0 0.0
        %356 = vmatpush1.msra.mxu0 0.0
        %357 = vmatprep.subr.mxu0 0.0
        %358 = vmatpush1.msra.mxu0 0.0
        %359 = vmatprep.subr.mxu0 0.0
        %360 = vmatpush1.msra.mxu0 0.0
        %361 = vmatprep.subr.mxu0 0.0
        %362 = vmatpush1.msra.mxu0 0.0
        %363 = vmatprep.subr.mxu0 0.0
        %364 = vmatpush1.msra.mxu0 0.0
        %365 = vmatprep.subr.mxu0 0.0
        %366 = vmatpush1.msra.mxu0 0.0
        %367 = vmatprep.subr.mxu0 0.0
        %368 = vmatpush1.msra.mxu0 0.0
        %369 = vmatprep.subr.mxu0 0.0
        %370 = vmatpush1.msra.mxu0 0.0
        %371 = vmatprep.subr.mxu0 0.0
        %372 = vmatpush1.msra.mxu0 0.0
        %373 = vmatprep.subr.mxu0 0.0
        %374 = vmatpush1.msra.mxu0 0.0
        %375 = vmatprep.subr.mxu0 0.0
        %376 = vmatpush1.msra.mxu0 0.0
        %377 = vmatprep.subr.mxu0 0.0
        %378 = vmatpush1.msra.mxu0 0.0
        %379 = vmatprep.subr.mxu0 0.0
        %380 = vmatpush1.msra.mxu0 0.0
        %381 = vmatprep.subr.mxu0 0.0
        %382 = vmatpush1.msra.mxu0 0.0
        %383 = vmatprep.subr.mxu0 0.0
        %384 = vmatpush1.msra.mxu0 0.0
        %385 = vmatprep.subr.mxu0 0.0
        %386 = vmatpush1.msra.mxu0 0.0
        %387 = vmatprep.subr.mxu0 0.0
        %388 = vmatpush1.msra.mxu0 0.0
        %389 = vmatprep.mubr.f32.mxu0 0.0
        %390 = vmatmul.mubr.f32.gmra.mrb[0].mxu0 %v323
        %v391 = vpop.f32.mrb[0].mxu0
        %v392 = vadd.f32 0.0, %v391
        %v393 = vpop.f32.mrb[0].mxu0
        %394 = vdwg.mxu0
        %395 = vst.msk [vmem:[%s291] sm:$0xff] %vm301, %v392
        %v396 = vld [vmem:[#allocation7] sm:$0xff]
        %v397 = vld [vmem:[#allocation7 + $0x8] sm:$0xff]
        %v398 = vld [vmem:[#allocation7 + $0x10] sm:$0xff]
        %v399 = vld [vmem:[#allocation7 + $0x18] sm:$0xff]
        %400 = vmatprep.subr.mxu0 0.0
        %401 = vmatpush1.msra.mxu0 %v396
        %402 = vmatprep.subr.mxu0 0.0
        %403 = vmatpush1.msra.mxu0 %v397
        %404 = vmatprep.subr.mxu0 0.0
        %405 = vmatpush1.msra.mxu0 %v398
        %406 = vmatprep.subr.mxu0 0.0
        %407 = vmatpush1.msra.mxu0 %v399
        %408 = vmatprep.subr.mxu0 0.0
        %409 = vmatpush1.msra.mxu0 0.0
        %410 = vmatprep.subr.mxu0 0.0
        %411 = vmatpush1.msra.mxu0 0.0
        %412 = vmatprep.subr.mxu0 0.0
        %413 = vmatpush1.msra.mxu0 0.0
        %414 = vmatprep.subr.mxu0 0.0
        %415 = vmatpush1.msra.mxu0 0.0
        %416 = vmatprep.subr.mxu0 0.0
        %417 = vmatpush1.msra.mxu0 0.0
        %418 = vmatprep.subr.mxu0 0.0
        %419 = vmatpush1.msra.mxu0 0.0
        %420 = vmatprep.subr.mxu0 0.0
        %421 = vmatpush1.msra.mxu0 0.0
        %422 = vmatprep.subr.mxu0 0.0
        %423 = vmatpush1.msra.mxu0 0.0
        %424 = vmatprep.subr.mxu0 0.0
        %425 = vmatpush1.msra.mxu0 0.0
        %426 = vmatprep.subr.mxu0 0.0
        %427 = vmatpush1.msra.mxu0 0.0
        %428 = vmatprep.subr.mxu0 0.0
        %429 = vmatpush1.msra.mxu0 0.0
        %430 = vmatprep.subr.mxu0 0.0
        %431 = vmatpush1.msra.mxu0 0.0
        %432 = vmatprep.subr.mxu0 0.0
        %433 = vmatpush1.msra.mxu0 0.0
        %434 = vmatprep.subr.mxu0 0.0
        %435 = vmatpush1.msra.mxu0 0.0
        %436 = vmatprep.subr.mxu0 0.0
        %437 = vmatpush1.msra.mxu0 0.0
        %438 = vmatprep.subr.mxu0 0.0
        %439 = vmatpush1.msra.mxu0 0.0
        %440 = vmatprep.subr.mxu0 0.0
        %441 = vmatpush1.msra.mxu0 0.0
        %442 = vmatprep.subr.mxu0 0.0
        %443 = vmatpush1.msra.mxu0 0.0
        %444 = vmatprep.subr.mxu0 0.0
        %445 = vmatpush1.msra.mxu0 0.0
        %446 = vmatprep.subr.mxu0 0.0
        %447 = vmatpush1.msra.mxu0 0.0
        %448 = vmatprep.subr.mxu0 0.0
        %449 = vmatpush1.msra.mxu0 0.0
        %450 = vmatprep.subr.mxu0 0.0
        %451 = vmatpush1.msra.mxu0 0.0
        %452 = vmatprep.subr.mxu0 0.0
        %453 = vmatpush1.msra.mxu0 0.0
        %454 = vmatprep.subr.mxu0 0.0
        %455 = vmatpush1.msra.mxu0 0.0
        %456 = vmatprep.subr.mxu0 0.0
        %457 = vmatpush1.msra.mxu0 0.0
        %458 = vmatprep.subr.mxu0 0.0
        %459 = vmatpush1.msra.mxu0 0.0
        %460 = vmatprep.subr.mxu0 0.0
        %461 = vmatpush1.msra.mxu0 0.0
        %462 = vmatprep.subr.mxu0 0.0
        %463 = vmatpush1.msra.mxu0 0.0
        %464 = vmatprep.mubr.f32.mxu0 0.0
        %465 = vmatmul.mubr.f32.gmra.mrb[0].mxu0 %v323
        %v466 = vpop.f32.mrb[0].mxu0
        %v467 = vadd.f32 0.0, %v466
        %v468 = vpop.f32.mrb[0].mxu0
        %469 = vdwg.mxu0
        %470 = vst.msk [vmem:[%s298] sm:$0xff] %vm301, %v467
        %s471 = sand.u32 %s140, 1
        %s472 = scalar_lea.sflag [#allocation4], %s471
        %s473 = sand.u32 %s140, 1
        %s474 = smul.addr %s473, 8
        %s475 = scalar_lea.vmem [#allocation8], %s474
        %s476 = sand.u32 %s168, 1
        %s477 = scalar_lea.sflag [#allocation10], %s476
        %s478 = sand.u32 %s168, 1
        %s479 = smul.addr %s478, 8
        %s480 = scalar_lea.vmem [#allocation9], %s479
        // Predicated region
        $region49: #{tpu_custom_call.1} parent=35 // pred_check
          %p481 = pneg %p150
        $region50: #{tpu_custom_call.1} parent=35 // pred_check_branch
          %483 = sbr.rel (%p481) target = $region52
        $region51: #{tpu_custom_call.1} parent=35 // pred_region
          %s485 = ssub.s32 128, 128
          %486 = vsyncadd %s472, %s485
          %s487 = sadd.s32 %s32, %s31
          %s488 = smul.addr %s487, 128
          %s489 = scalar_lea.hbm %s4, %s488
          %s491 = sshll.u32 %s475, 4
          %s492 = int_to_ptr.vmem [resolvable:$true] %s491
          %494 = dma.vmem_to_hbm [thread:$0]  %s492, 128, %s489, %s472
        $region52: #{tpu_custom_call.1} parent=35 // pred_fallthru
          _
        // Predicated region
        $region53: #{tpu_custom_call.1} parent=35 // pred_check
          %p495 = pneg %p178
        $region54: #{tpu_custom_call.1} parent=35 // pred_check_branch
          %497 = sbr.rel (%p495) target = $region56
        $region55: #{tpu_custom_call.1} parent=35 // pred_region
          %s499 = ssub.s32 128, 128
          %500 = vsyncadd %s477, %s499
          %s501 = sadd.s32 %s32, %s31
          %s502 = smul.addr %s501, 128
          %s503 = scalar_lea.hbm %s5, %s502
          %s505 = sshll.u32 %s480, 4
          %s506 = int_to_ptr.vmem [resolvable:$true] %s505
          %508 = dma.vmem_to_hbm [thread:$0]  %s506, 128, %s503, %s477
        $region56: #{tpu_custom_call.1} parent=35 // pred_fallthru
          _
      $region36: #{tpu_custom_call.1} parent=5 // pred_fallthru
        _
      %p509 = scmp.le.s32.totalorder 2, %s22
      // Predicated region
      $region57: #{tpu_custom_call.1} parent=5 // pred_check
        %p510 = pneg %p509
      $region58: #{tpu_custom_call.1} parent=5 // pred_check_branch
        %512 = sbr.rel (%p510) target = $region60
      $region59: #{tpu_custom_call.1} parent=5 // pred_region
        %s513 = ssub.s32 %s22, 2
        // Predicated region
        $region61: #{tpu_custom_call.1} parent=59 // pred_check
          %p514 = pneg %p156
        $region62: #{tpu_custom_call.1} parent=59 // pred_check_branch
          %516 = sbr.rel (%p514) target = $region64
        $region63: #{tpu_custom_call.1} parent=59 // pred_region
          %s517 = sand.u32 %s141, 1
          %s518 = scalar_lea.sflag [#allocation4], %s517
          %s519 = sand.u32 %s141, 1
          %s520 = smul.addr %s519, 8
          %s521 = scalar_lea.vmem [#allocation8], %s520
          %522 = dma.done %s518, 128
        $region64: #{tpu_custom_call.1} parent=59 // pred_fallthru
          _
        // Predicated region
        $region65: #{tpu_custom_call.1} parent=59 // pred_check
          %p523 = pneg %p184
        $region66: #{tpu_custom_call.1} parent=59 // pred_check_branch
          %525 = sbr.rel (%p523) target = $region68
        $region67: #{tpu_custom_call.1} parent=59 // pred_region
          %s526 = sand.u32 %s169, 1
          %s527 = scalar_lea.sflag [#allocation10], %s526
          %s528 = sand.u32 %s169, 1
          %s529 = smul.addr %s528, 8
          %s530 = scalar_lea.vmem [#allocation9], %s529
          %531 = dma.done %s527, 128
        $region68: #{tpu_custom_call.1} parent=59 // pred_fallthru
          _
      $region60: #{tpu_custom_call.1} parent=5 // pred_fallthru
        _
    $region6: #{tpu_custom_call.1} parent=1 // loop_footer
      %s26 = sadd.s32 1, %s22
    $region7: #{tpu_custom_call.1} parent=1 // loop_footer_branch
      %21 = sbr.rel target = $region3
    $region8: #{tpu_custom_call.1} parent=1 // loop_exit
      _
    %532 = vsyncpa [#allocation3], 1
    %s533 = scalar_lea.sflag [#allocation3], 1
    %534 = vsyncpa %s533, 1
    %535 = vsyncpa [#allocation6], 1
    %536 = vsyncpa [#allocation4], 1
    %s537 = scalar_lea.sflag [#allocation4], 1
    %538 = vsyncpa %s537, 1
    %539 = vsyncpa [#allocation10], 1
    %s540 = scalar_lea.sflag [#allocation10], 1
    %541 = vsyncpa %s540, 1

// kernel: tpu_custom_call.1
$region0: #{tpu_custom_call.1}
  #allocation0 [shape = 'u32[]', space=smem, size = 0x4, offset = 0x4, fixed_abs, tag = 'smem constant byte address 0x4 - core index']
  #allocation1 [shape = 'u32[144,128]{1,0:T(1,128)}', space=vmem, size = 0x12000, scoped, tag = 'internal scratch']
  %s0 = inlined_call_operand.hbm [shape: f32[2,8,32], index: 0, kind: input, shape index: {}]
  %s1 = inlined_call_operand.vmem [shape: f32[1,32], index: 1, kind: input, shape index: {}]
  %s2 = inlined_call_operand.hbm [shape: f32[32,32], index: 2, kind: input, shape index: {}]
  %s3 = inlined_call_operand.hbm [shape: f32[32,32], index: 3, kind: input, shape index: {}]
  %s4 = inlined_call_operand.hbm [shape: f32[2,8,32], index: 4, kind: output, shape index: {0}]
  %s5 = inlined_call_operand.hbm [shape: f32[2,8,32], index: 5, kind: output, shape index: {1}]
  %6 = xla_tuple %s4, %s5
  %s7 = sld [smem:[#allocation0]]
  $region69: #{tpu_custom_call.1} parent=0
    _
  %s9 = ssub.s32 1, %s7
  %s10 = scalar_select 0, %s9, %s7
  $region1: #{tpu_custom_call.1} parent=0
    #allocation2 [shape = 'u8[8192]{0}', space=vmem, size = 0x2000, scoped, tag = 'input window, operand 0']
    #allocation3 [shape = 's32[2]{0}', space=sflag, size = 0x8, scoped, tag = 'scoped memory for tpu_custom_call.1']
    #allocation4 [shape = 's32[2]{0}', space=sflag, size = 0x8, scoped, tag = 'scoped memory for tpu_custom_call.1']
    #allocation5 [shape = 'u8[16384]{0}', space=vmem, size = 0x4000, scoped, tag = 'input window, operand 2, single buffered']
    #allocation6 [shape = 's32[1]{0}', space=sflag, size = 0x4, scoped, tag = 'scoped memory for tpu_custom_call.1']
    #allocation7 [shape = 'u8[16384]{0}', space=vmem, size = 0x4000, scoped, tag = 'input window, operand 3, single buffered']
    #allocation8 [shape = 'u8[8192]{0}', space=vmem, size = 0x2000, scoped, tag = 'output window, operand 0']
    #allocation9 [shape = 'u8[8192]{0}', space=vmem, size = 0x2000, scoped, tag = 'output window, operand 1']
    #allocation10 [shape = 's32[2]{0}', space=sflag, size = 0x8, scoped, tag = 'scoped memory for tpu_custom_call.1']
    %11 = vsyncpa [#allocation3], 0
    %s12 = scalar_lea.sflag [#allocation3], 1
    %13 = vsyncpa %s12, 0
    %14 = vsyncpa [#allocation6], 0
    %15 = vsyncpa [#allocation4], 0
    %s16 = scalar_lea.sflag [#allocation4], 1
    %17 = vsyncpa %s16, 0
    %18 = vsyncpa [#allocation10], 0
    %s19 = scalar_lea.sflag [#allocation10], 1
    %20 = vsyncpa %s19, 0
    loop: start=0, step=1, limit=4
    $region2: #{tpu_custom_call.1} parent=1 // loop_pre_header
      _
    $region3: #{tpu_custom_call.1} parent=1 // loop_header
      %s22 = sphi 0, %s26
      %p23 = scmp.ge.s32.totalorder %s22, 4
      %s29 = sphi 0, %s41
      %s30 = sphi 0, %s37
      %s31 = sphi 0, %s29
      %s32 = sphi 0, %s30
      %s33 = sphi 0, %s31
      %s34 = sphi 0, %s32
      %s46 = sphi 0, %s48
      %s49 = sphi 0, %s46
      %s50 = sphi 0, %s49
      %s66 = sphi 0, %s50
      %s70 = sphi 0, %s70
      %s72 = sphi 0, %s70
      %s73 = sphi 0, %s72
      %s87 = sphi 0, %s73
      %s91 = sphi 0, %s91
      %s93 = sphi 0, %s91
      %s94 = sphi 0, %s93
      %s108 = sphi 0, %s94
      %s112 = sphi 0, %s112
      %s114 = sphi 0, %s112
      %s115 = sphi 0, %s114
      %s129 = sphi 0, %s115
      %s137 = sphi 0, %s139
      %s140 = sphi 0, %s137
      %s141 = sphi 0, %s140
      %s157 = sphi 0, %s141
      %s165 = sphi 0, %s167
      %s168 = sphi 0, %s165
      %s169 = sphi 0, %s168
      %s185 = sphi 0, %s169
    $region4: #{tpu_custom_call.1} parent=1 // loop_header_branch
      %25 = sbr.rel (%p23) target = $region8
    $region5: #{tpu_custom_call.1} parent=1 // loop_body
      %s27 = ssub.s32 %s22, 1
      %s28 = ssub.s32 %s22, 2
      %s35 = sadd.s32 1, %s30
      %p36 = scmp.ge.s32.totalorder %s35, 1
      %s37 = scalar_select %p36, 0, %s35
      %s38 = sadd.s32 1, %s29
      %s39 = scalar_select %p36, %s38, %s29
      %p40 = scmp.ge.s32.totalorder %s39, 2
      %s41 = scalar_select %p40, 0, %s39
      %s42 = ssub.s32 %s29, %s41
      %s43 = ssub.s32 %s30, %s37
      %s44 = sor.u32 %s42, %s43
      %p45 = scmp.eq.s32.totalorder %s44, 0
      %s47 = sadd.s32 %s46, 1
      %s48 = scalar_select %p45, %s46, %s47
      %p51 = pneg %p45
      %p52 = scmp.eq.s32.totalorder %s22, 1
      %p53 = por %p51, %p52
      %p54 = scmp.ne.s32.totalorder %s46, %s49
      %p55 = scmp.eq.s32.totalorder %s22, 0
      %p56 = por %p54, %p55
      %p57 = scmp.ne.s32.totalorder %s46, %s49
      %p58 = scmp.eq.s32.totalorder %s27, 1
      %p59 = por %p57, %p58
      %p60 = scmp.ne.s32.totalorder %s49, %s50
      %p61 = scmp.eq.s32.totalorder %s27, 0
      %p62 = por %p60, %p61
      %p63 = scmp.ne.s32.totalorder %s49, %s50
      %p64 = scmp.eq.s32.totalorder %s28, 1
      %p65 = por %p63, %p64
      %p67 = scmp.ne.s32.totalorder %s50, %s66
      %p68 = scmp.eq.s32.totalorder %s28, 0
      %p69 = por %p67, %p68
      %s71 = sadd.s32 %s70, 1
      %p74 = scmp.eq.s32.totalorder %s22, 1
      %p75 = scmp.ne.s32.totalorder %s70, %s72
      %p76 = scmp.eq.s32.totalorder %s22, 0
      %p77 = por %p75, %p76
      %p78 = scmp.ne.s32.totalorder %s70, %s72
      %p79 = scmp.eq.s32.totalorder %s27, 1
      %p80 = por %p78, %p79
      %p81 = scmp.ne.s32.totalorder %s72, %s73
      %p82 = scmp.eq.s32.totalorder %s27, 0
      %p83 = por %p81, %p82
      %p84 = scmp.ne.s32.totalorder %s72, %s73
      %p85 = scmp.eq.s32.totalorder %s28, 1
      %p86 = por %p84, %p85
      %p88 = scmp.ne.s32.totalorder %s73, %s87
      %p89 = scmp.eq.s32.totalorder %s28, 0
      %p90 = por %p88, %p89
      %s92 = sadd.s32 %s91, 1
      %p95 = scmp.eq.s32.totalorder %s22, 1
      %p96 = scmp.ne.s32.totalorder %s91, %s93
      %p97 = scmp.eq.s32.totalorder %s22, 0
      %p98 = por %p96, %p97
      %p99 = scmp.ne.s32.totalorder %s91, %s93
      %p100 = scmp.eq.s32.totalorder %s27, 1
      %p101 = por %p99, %p100
      %p102 = scmp.ne.s32.totalorder %s93, %s94
      %p103 = scmp.eq.s32.totalorder %s27, 0
      %p104 = por %p102, %p103
      %p105 = scmp.ne.s32.totalorder %s93, %s94
      %p106 = scmp.eq.s32.totalorder %s28, 1
      %p107 = por %p105, %p106
      %p109 = scmp.ne.s32.totalorder %s94, %s108
      %p110 = scmp.eq.s32.totalorder %s28, 0
      %p111 = por %p109, %p110
      %s113 = sadd.s32 %s112, 1
      %p116 = scmp.eq.s32.totalorder %s22, 1
      %p117 = scmp.ne.s32.totalorder %s112, %s114
      %p118 = scmp.eq.s32.totalorder %s22, 0
      %p119 = por %p117, %p118
      %p120 = scmp.ne.s32.totalorder %s112, %s114
      %p121 = scmp.eq.s32.totalorder %s27, 1
      %p122 = por %p120, %p121
      %p123 = scmp.ne.s32.totalorder %s114, %s115
      %p124 = scmp.eq.s32.totalorder %s27, 0
      %p125 = por %p123, %p124
      %p126 = scmp.ne.s32.totalorder %s114, %s115
      %p127 = scmp.eq.s32.totalorder %s28, 1
      %p128 = por %p126, %p127
      %p130 = scmp.ne.s32.totalorder %s115, %s129
      %p131 = scmp.eq.s32.totalorder %s28, 0
      %p132 = por %p130, %p131
      %s133 = ssub.s32 %s29, %s41
      %s134 = ssub.s32 %s30, %s37
      %s135 = sor.u32 %s133, %s134
      %p136 = scmp.eq.s32.totalorder %s135, 0
      %s138 = sadd.s32 %s137, 1
      %s139 = scalar_select %p136, %s137, %s138
      %p142 = pneg %p136
      %p143 = scmp.eq.s32.totalorder %s22, 1
      %p144 = por %p142, %p143
      %p145 = scmp.ne.s32.totalorder %s137, %s140
      %p146 = scmp.eq.s32.totalorder %s22, 0
      %p147 = por %p145, %p146
      %p148 = scmp.ne.s32.totalorder %s137, %s140
      %p149 = scmp.eq.s32.totalorder %s27, 1
      %p150 = por %p148, %p149
      %p151 = scmp.ne.s32.totalorder %s140, %s141
      %p152 = scmp.eq.s32.totalorder %s27, 0
      %p153 = por %p151, %p152
      %p154 = scmp.ne.s32.totalorder %s140, %s141
      %p155 = scmp.eq.s32.totalorder %s28, 1
      %p156 = por %p154, %p155
      %p158 = scmp.ne.s32.totalorder %s141, %s157
      %p159 = scmp.eq.s32.totalorder %s28, 0
      %p160 = por %p158, %p159
      %s161 = ssub.s32 %s29, %s41
      %s162 = ssub.s32 %s30, %s37
      %s163 = sor.u32 %s161, %s162
      %p164 = scmp.eq.s32.totalorder %s163, 0
      %s166 = sadd.s32 %s165, 1
      %s167 = scalar_select %p164, %s165, %s166
      %p170 = pneg %p164
      %p171 = scmp.eq.s32.totalorder %s22, 1
      %p172 = por %p170, %p171
      %p173 = scmp.ne.s32.totalorder %s165, %s168
      %p174 = scmp.eq.s32.totalorder %s22, 0
      %p175 = por %p173, %p174
      %p176 = scmp.ne.s32.totalorder %s165, %s168
      %p177 = scmp.eq.s32.totalorder %s27, 1
      %p178 = por %p176, %p177
      %p179 = scmp.ne.s32.totalorder %s168, %s169
      %p180 = scmp.eq.s32.totalorder %s27, 0
      %p181 = por %p179, %p180
      %p182 = scmp.ne.s32.totalorder %s168, %s169
      %p183 = scmp.eq.s32.totalorder %s28, 1
      %p184 = por %p182, %p183
      %p186 = scmp.ne.s32.totalorder %s169, %s185
      %p187 = scmp.eq.s32.totalorder %s28, 0
      %p188 = por %p186, %p187
      %p189 = scmp.le.s32.totalorder 1, %s22
      %p190 = scmp.lt.s32.totalorder %s22, 3
      %p191 = pnand %p189, %p190
      %p192 = pneg %p191
      // Predicated region
      $region9: #{tpu_custom_call.1} parent=5 // pred_check
        _
      $region10: #{tpu_custom_call.1} parent=5 // pred_check_branch
        %194 = sbr.rel (%p191) target = $region12
      $region11: #{tpu_custom_call.1} parent=5 // pred_region
        %s195 = ssub.s32 %s22, 1
        // Predicated region
        $region13: #{tpu_custom_call.1} parent=11 // pred_check
          %p196 = pneg %p83
        $region14: #{tpu_custom_call.1} parent=11 // pred_check_branch
          %198 = sbr.rel (%p196) target = $region16
        $region15: #{tpu_custom_call.1} parent=11 // pred_region
          _
        $region16: #{tpu_custom_call.1} parent=11 // pred_fallthru
          _
        // Predicated region
        $region17: #{tpu_custom_call.1} parent=11 // pred_check
          %p199 = pneg %p104
        $region18: #{tpu_custom_call.1} parent=11 // pred_check_branch
          %201 = sbr.rel (%p199) target = $region20
        $region19: #{tpu_custom_call.1} parent=11 // pred_region
          %s203 = ssub.s32 512, 512
          %204 = vsyncadd [#allocation6], %s203
          %s205 = sshll.u32 [#allocation5], 4
          %s206 = int_to_ptr.vmem [resolvable:$true] %s205
          %211 = dma.hbm_to_vmem [thread:$0]  %s2, 512, %s206, [#allocation6], 128, 128, 8
        $region20: #{tpu_custom_call.1} parent=11 // pred_fallthru
          _
        // Predicated region
        $region21: #{tpu_custom_call.1} parent=11 // pred_check
          %p212 = pneg %p125
        $region22: #{tpu_custom_call.1} parent=11 // pred_check_branch
          %214 = sbr.rel (%p212) target = $region24
        $region23: #{tpu_custom_call.1} parent=11 // pred_region
          %s216 = ssub.s32 512, 512
          %217 = vsyncadd [#allocation6], %s216
          %s218 = sshll.u32 [#allocation7], 4
          %s219 = int_to_ptr.vmem [resolvable:$true] %s218
          %224 = dma.hbm_to_vmem [thread:$0]  %s3, 512, %s219, [#allocation6], 128, 128, 8
        $region24: #{tpu_custom_call.1} parent=11 // pred_fallthru
          _
      $region12: #{tpu_custom_call.1} parent=5 // pred_fallthru
        _
      %p225 = scmp.lt.s32.totalorder %s22, 2
      // Predicated region
      $region25: #{tpu_custom_call.1} parent=5 // pred_check
        %p226 = pneg %p225
      $region26: #{tpu_custom_call.1} parent=5 // pred_check_branch
        %228 = sbr.rel (%p226) target = $region28
      $region27: #{tpu_custom_call.1} parent=5 // pred_region
        // Predicated region
        $region29: #{tpu_custom_call.1} parent=27 // pred_check
          %p229 = pneg %p56
        $region30: #{tpu_custom_call.1} parent=27 // pred_check_branch
          %231 = sbr.rel (%p229) target = $region32
        $region31: #{tpu_custom_call.1} parent=27 // pred_region
          %s232 = sand.u32 %s46, 1
          %s233 = scalar_lea.sflag [#allocation3], %s232
          %s234 = sand.u32 %s46, 1
          %s235 = smul.addr %s234, 8
          %s236 = scalar_lea.vmem [#allocation2], %s235
          %s238 = ssub.s32 128, 128
          %239 = vsyncadd %s233, %s238
          %s240 = sadd.s32 %s30, %s29
          %s241 = smul.addr %s240, 128
          %s242 = scalar_lea.hbm %s0, %s241
          %s244 = sshll.u32 %s236, 4
          %s245 = int_to_ptr.vmem [resolvable:$true] %s244
          %247 = dma.hbm_to_vmem [thread:$0]  %s242, 128, %s245, %s233
        $region32: #{tpu_custom_call.1} parent=27 // pred_fallthru
          _
      $region28: #{tpu_custom_call.1} parent=5 // pred_fallthru
        _
      %p248 = scmp.le.s32.totalorder 1, %s22
      %p249 = scmp.lt.s32.totalorder %s22, 3
      %p250 = pnand %p248, %p249
      %p251 = pneg %p250
      // Predicated region
      $region33: #{tpu_custom_call.1} parent=5 // pred_check
        _
      $region34: #{tpu_custom_call.1} parent=5 // pred_check_branch
        %253 = sbr.rel (%p250) target = $region36
      $region35: #{tpu_custom_call.1} parent=5 // pred_region
        %s254 = ssub.s32 %s22, 1
        %s255 = sand.u32 %s49, 1
        %s256 = scalar_lea.sflag [#allocation3], %s255
        %s257 = sand.u32 %s49, 1
        %s258 = smul.addr %s257, 8
        %s259 = scalar_lea.vmem [#allocation2], %s258
        // Predicated region
        $region37: #{tpu_custom_call.1} parent=35 // pred_check
          %p260 = pneg %p62
        $region38: #{tpu_custom_call.1} parent=35 // pred_check_branch
          %262 = sbr.rel (%p260) target = $region40
        $region39: #{tpu_custom_call.1} parent=35 // pred_region
          %263 = dma.done %s256, 128
        $region40: #{tpu_custom_call.1} parent=35 // pred_fallthru
          _
        // Predicated region
        $region41: #{tpu_custom_call.1} parent=35 // pred_check
          %p264 = pneg %p104
        $region42: #{tpu_custom_call.1} parent=35 // pred_check_branch
          %266 = sbr.rel (%p264) target = $region44
        $region43: #{tpu_custom_call.1} parent=35 // pred_region
          %267 = dma.done [#allocation6], 512
        $region44: #{tpu_custom_call.1} parent=35 // pred_fallthru
          _
        // Predicated region
        $region45: #{tpu_custom_call.1} parent=35 // pred_check
          %p268 = pneg %p125
        $region46: #{tpu_custom_call.1} parent=35 // pred_check_branch
          %270 = sbr.rel (%p268) target = $region48
        $region47: #{tpu_custom_call.1} parent=35 // pred_region
          %271 = dma.done [#allocation6], 512
        $region48: #{tpu_custom_call.1} parent=35 // pred_fallthru
          _
        %s272 = sand.u32 %s49, 1
        %s273 = scalar_lea.sflag [#allocation3], %s272
        %s274 = sand.u32 %s49, 1
        %s275 = smul.addr %s274, 8
        %s276 = scalar_lea.vmem [#allocation2], %s275
        %p277 = pneg %p62
        %p278 = pneg %p59
        %p279 = pneg %p83
        %p280 = pneg %p80
        %p281 = pneg %p104
        %p282 = pneg %p101
        %p283 = pneg %p125
        %p284 = pneg %p122
        %p285 = pneg %p153
        %p286 = pneg %p150
        %s287 = sand.u32 %s140, 1
        %s288 = scalar_lea.sflag [#allocation4], %s287
        %s289 = sand.u32 %s140, 1
        %s290 = smul.addr %s289, 8
        %s291 = scalar_lea.vmem [#allocation8], %s290
        %p292 = pneg %p181
        %p293 = pneg %p178
        %s294 = sand.u32 %s168, 1
        %s295 = scalar_lea.sflag [#allocation10], %s294
        %s296 = sand.u32 %s168, 1
        %s297 = smul.addr %s296, 8
        %s298 = scalar_lea.vmem [#allocation9], %s297
        %v299 = vld [vmem:[%s259] sm:$0xff]
        %v300 = vmul.f32 %v299, %v299
        %vm301 = vcmask 261120
        %v302 = vsel %vm301, %v300, 0.0
        %303 = vadd.xlane.f32.xlu0 %v302
        %v304 = vpop.xlane.xlu0 %303
        %v305 = vrcp.pop 32.0
        %v306 = vmul.f32 %v304, %v305
        %v307 = vadd.f32 %v306, 1e-05
        %v308 = vrsqrt.pop %v307
        %v309 = vmul.f32 %v299, %v308
        %v310 = vld [vmem:[%s1] sm:$0x1]
        %v312 = vlaneseq
        %v313 = vshrl.u32 %v312, 7
        %v314 = vsub.s32 0, %v313
        %v315 = vrot.slane %v310, %v314
        %v317 = vmul.f32 %v309, %v315
        %v318 = vld [vmem:[#allocation5] sm:$0xff]
        %v319 = vld [vmem:[#allocation5 + $0x8] sm:$0xff]
        %v320 = vld [vmem:[#allocation5 + $0x10] sm:$0xff]
        %v321 = vld [vmem:[#allocation5 + $0x18] sm:$0xff]
        %v323 = vsel %vm301, %v317, 0
        %325 = vmatprep.subr.mxu0 0.0
        %326 = vmatpush1.msra.mxu0 %v318
        %327 = vmatprep.subr.mxu0 0.0
        %328 = vmatpush1.msra.mxu0 %v319
        %329 = vmatprep.subr.mxu0 0.0
        %330 = vmatpush1.msra.mxu0 %v320
        %331 = vmatprep.subr.mxu0 0.0
        %332 = vmatpush1.msra.mxu0 %v321
        %333 = vmatprep.subr.mxu0 0.0
        %334 = vmatpush1.msra.mxu0 0.0
        %335 = vmatprep.subr.mxu0 0.0
        %336 = vmatpush1.msra.mxu0 0.0
        %337 = vmatprep.subr.mxu0 0.0
        %338 = vmatpush1.msra.mxu0 0.0
        %339 = vmatprep.subr.mxu0 0.0
        %340 = vmatpush1.msra.mxu0 0.0
        %341 = vmatprep.subr.mxu0 0.0
        %342 = vmatpush1.msra.mxu0 0.0
        %343 = vmatprep.subr.mxu0 0.0
        %344 = vmatpush1.msra.mxu0 0.0
        %345 = vmatprep.subr.mxu0 0.0
        %346 = vmatpush1.msra.mxu0 0.0
        %347 = vmatprep.subr.mxu0 0.0
        %348 = vmatpush1.msra.mxu0 0.0
        %349 = vmatprep.subr.mxu0 0.0
        %350 = vmatpush1.msra.mxu0 0.0
        %351 = vmatprep.subr.mxu0 0.0
        %352 = vmatpush1.msra.mxu0 0.0
        %353 = vmatprep.subr.mxu0 0.0
        %354 = vmatpush1.msra.mxu0 0.0
        %355 = vmatprep.subr.mxu0 0.0
        %356 = vmatpush1.msra.mxu0 0.0
        %357 = vmatprep.subr.mxu0 0.0
        %358 = vmatpush1.msra.mxu0 0.0
        %359 = vmatprep.subr.mxu0 0.0
        %360 = vmatpush1.msra.mxu0 0.0
        %361 = vmatprep.subr.mxu0 0.0
        %362 = vmatpush1.msra.mxu0 0.0
        %363 = vmatprep.subr.mxu0 0.0
        %364 = vmatpush1.msra.mxu0 0.0
        %365 = vmatprep.subr.mxu0 0.0
        %366 = vmatpush1.msra.mxu0 0.0
        %367 = vmatprep.subr.mxu0 0.0
        %368 = vmatpush1.msra.mxu0 0.0
        %369 = vmatprep.subr.mxu0 0.0
        %370 = vmatpush1.msra.mxu0 0.0
        %371 = vmatprep.subr.mxu0 0.0
        %372 = vmatpush1.msra.mxu0 0.0
        %373 = vmatprep.subr.mxu0 0.0
        %374 = vmatpush1.msra.mxu0 0.0
        %375 = vmatprep.subr.mxu0 0.0
        %376 = vmatpush1.msra.mxu0 0.0
        %377 = vmatprep.subr.mxu0 0.0
        %378 = vmatpush1.msra.mxu0 0.0
        %379 = vmatprep.subr.mxu0 0.0
        %380 = vmatpush1.msra.mxu0 0.0
        %381 = vmatprep.subr.mxu0 0.0
        %382 = vmatpush1.msra.mxu0 0.0
        %383 = vmatprep.subr.mxu0 0.0
        %384 = vmatpush1.msra.mxu0 0.0
        %385 = vmatprep.subr.mxu0 0.0
        %386 = vmatpush1.msra.mxu0 0.0
        %387 = vmatprep.subr.mxu0 0.0
        %388 = vmatpush1.msra.mxu0 0.0
        %389 = vmatprep.mubr.f32.mxu0 0.0
        %390 = vmatmul.mubr.f32.gmra.mrb[0].mxu0 %v323
        %v391 = vpop.f32.mrb[0].mxu0
        %v392 = vadd.f32 0.0, %v391
        %v393 = vpop.f32.mrb[0].mxu0
        %394 = vdwg.mxu0
        %395 = vst.msk [vmem:[%s291] sm:$0xff] %vm301, %v392
        %v396 = vld [vmem:[#allocation7] sm:$0xff]
        %v397 = vld [vmem:[#allocation7 + $0x8] sm:$0xff]
        %v398 = vld [vmem:[#allocation7 + $0x10] sm:$0xff]
        %v399 = vld [vmem:[#allocation7 + $0x18] sm:$0xff]
        %400 = vmatprep.subr.mxu0 0.0
        %401 = vmatpush1.msra.mxu0 %v396
        %402 = vmatprep.subr.mxu0 0.0
        %403 = vmatpush1.msra.mxu0 %v397
        %404 = vmatprep.subr.mxu0 0.0
        %405 = vmatpush1.msra.mxu0 %v398
        %406 = vmatprep.subr.mxu0 0.0
        %407 = vmatpush1.msra.mxu0 %v399
        %408 = vmatprep.subr.mxu0 0.0
        %409 = vmatpush1.msra.mxu0 0.0
        %410 = vmatprep.subr.mxu0 0.0
        %411 = vmatpush1.msra.mxu0 0.0
        %412 = vmatprep.subr.mxu0 0.0
        %413 = vmatpush1.msra.mxu0 0.0
        %414 = vmatprep.subr.mxu0 0.0
        %415 = vmatpush1.msra.mxu0 0.0
        %416 = vmatprep.subr.mxu0 0.0
        %417 = vmatpush1.msra.mxu0 0.0
        %418 = vmatprep.subr.mxu0 0.0
        %419 = vmatpush1.msra.mxu0 0.0
        %420 = vmatprep.subr.mxu0 0.0
        %421 = vmatpush1.msra.mxu0 0.0
        %422 = vmatprep.subr.mxu0 0.0
        %423 = vmatpush1.msra.mxu0 0.0
        %424 = vmatprep.subr.mxu0 0.0
        %425 = vmatpush1.msra.mxu0 0.0
        %426 = vmatprep.subr.mxu0 0.0
        %427 = vmatpush1.msra.mxu0 0.0
        %428 = vmatprep.subr.mxu0 0.0
        %429 = vmatpush1.msra.mxu0 0.0
        %430 = vmatprep.subr.mxu0 0.0
        %431 = vmatpush1.msra.mxu0 0.0
        %432 = vmatprep.subr.mxu0 0.0
        %433 = vmatpush1.msra.mxu0 0.0
        %434 = vmatprep.subr.mxu0 0.0
        %435 = vmatpush1.msra.mxu0 0.0
        %436 = vmatprep.subr.mxu0 0.0
        %437 = vmatpush1.msra.mxu0 0.0
        %438 = vmatprep.subr.mxu0 0.0
        %439 = vmatpush1.msra.mxu0 0.0
        %440 = vmatprep.subr.mxu0 0.0
        %441 = vmatpush1.msra.mxu0 0.0
        %442 = vmatprep.subr.mxu0 0.0
        %443 = vmatpush1.msra.mxu0 0.0
        %444 = vmatprep.subr.mxu0 0.0
        %445 = vmatpush1.msra.mxu0 0.0
        %446 = vmatprep.subr.mxu0 0.0
        %447 = vmatpush1.msra.mxu0 0.0
        %448 = vmatprep.subr.mxu0 0.0
        %449 = vmatpush1.msra.mxu0 0.0
        %450 = vmatprep.subr.mxu0 0.0
        %451 = vmatpush1.msra.mxu0 0.0
        %452 = vmatprep.subr.mxu0 0.0
        %453 = vmatpush1.msra.mxu0 0.0
        %454 = vmatprep.subr.mxu0 0.0
        %455 = vmatpush1.msra.mxu0 0.0
        %456 = vmatprep.subr.mxu0 0.0
        %457 = vmatpush1.msra.mxu0 0.0
        %458 = vmatprep.subr.mxu0 0.0
        %459 = vmatpush1.msra.mxu0 0.0
        %460 = vmatprep.subr.mxu0 0.0
        %461 = vmatpush1.msra.mxu0 0.0
        %462 = vmatprep.subr.mxu0 0.0
        %463 = vmatpush1.msra.mxu0 0.0
        %464 = vmatprep.mubr.f32.mxu0 0.0
        %465 = vmatmul.mubr.f32.gmra.mrb[0].mxu0 %v323
        %v466 = vpop.f32.mrb[0].mxu0
        %v467 = vadd.f32 0.0, %v466
        %v468 = vpop.f32.mrb[0].mxu0
        %469 = vdwg.mxu0
        %470 = vst.msk [vmem:[%s298] sm:$0xff] %vm301, %v467
        %s471 = sand.u32 %s140, 1
        %s472 = scalar_lea.sflag [#allocation4], %s471
        %s473 = sand.u32 %s140, 1
        %s474 = smul.addr %s473, 8
        %s475 = scalar_lea.vmem [#allocation8], %s474
        %s476 = sand.u32 %s168, 1
        %s477 = scalar_lea.sflag [#allocation10], %s476
        %s478 = sand.u32 %s168, 1
        %s479 = smul.addr %s478, 8
        %s480 = scalar_lea.vmem [#allocation9], %s479
        // Predicated region
        $region49: #{tpu_custom_call.1} parent=35 // pred_check
          %p481 = pneg %p150
        $region50: #{tpu_custom_call.1} parent=35 // pred_check_branch
          %483 = sbr.rel (%p481) target = $region52
        $region51: #{tpu_custom_call.1} parent=35 // pred_region
          %s485 = ssub.s32 128, 128
          %486 = vsyncadd %s472, %s485
          %s487 = sadd.s32 %s32, %s31
          %s488 = smul.addr %s487, 128
          %s489 = scalar_lea.hbm %s4, %s488
          %s491 = sshll.u32 %s475, 4
          %s492 = int_to_ptr.vmem [resolvable:$true] %s491
          %494 = dma.vmem_to_hbm [thread:$0]  %s492, 128, %s489, %s472
        $region52: #{tpu_custom_call.1} parent=35 // pred_fallthru
          _
        // Predicated region
        $region53: #{tpu_custom_call.1} parent=35 // pred_check
          %p495 = pneg %p178
        $region54: #{tpu_custom_call.1} parent=35 // pred_check_branch
          %497 = sbr.rel (%p495) target = $region56
        $region55: #{tpu_custom_call.1} parent=35 // pred_region
          %s499 = ssub.s32 128, 128
          %500 = vsyncadd %s477, %s499
          %s501 = sadd.s32 %s32, %s31
          %s502 = smul.addr %s501, 128
          %s503 = scalar_lea.hbm %s5, %s502
          %s505 = sshll.u32 %s480, 4
          %s506 = int_to_ptr.vmem [resolvable:$true] %s505
          %508 = dma.vmem_to_hbm [thread:$0]  %s506, 128, %s503, %s477
        $region56: #{tpu_custom_call.1} parent=35 // pred_fallthru
          _
      $region36: #{tpu_custom_call.1} parent=5 // pred_fallthru
        _
      %p509 = scmp.le.s32.totalorder 2, %s22
      // Predicated region
      $region57: #{tpu_custom_call.1} parent=5 // pred_check
        %p510 = pneg %p509
      $region58: #{tpu_custom_call.1} parent=5 // pred_check_branch
        %512 = sbr.rel (%p510) target = $region60
      $region59: #{tpu_custom_call.1} parent=5 // pred_region
        %s513 = ssub.s32 %s22, 2
        // Predicated region
        $region61: #{tpu_custom_call.1} parent=59 // pred_check
          %p514 = pneg %p156
        $region62: #{tpu_custom_call.1} parent=59 // pred_check_branch
          %516 = sbr.rel (%p514) target = $region64
        $region63: #{tpu_custom_call.1} parent=59 // pred_region
          %s517 = sand.u32 %s141, 1
          %s518 = scalar_lea.sflag [#allocation4], %s517
          %s519 = sand.u32 %s141, 1
          %s520 = smul.addr %s519, 8
          %s521 = scalar_lea.vmem [#allocation8], %s520
          %522 = dma.done %s518, 128
        $region64: #{tpu_custom_call.1} parent=59 // pred_fallthru
          _
        // Predicated region
        $region65: #{tpu_custom_call.1} parent=59 // pred_check
          %p523 = pneg %p184
        $region66: #{tpu_custom_call.1} parent=59 // pred_check_branch
          %525 = sbr.rel (%p523) target = $region68
        $region67: #{tpu_custom_call.1} parent=59 // pred_region
          %s526 = sand.u32 %s169, 1
          %s527 = scalar_lea.sflag [#allocation10], %s526
          %s528 = sand.u32 %s169, 1
          %s529 = smul.addr %s528, 8
          %s530 = scalar_lea.vmem [#allocation9], %s529
          %531 = dma.done %s527, 128
        $region68: #{tpu_custom_call.1} parent=59 // pred_fallthru
          _
      $region60: #{tpu_custom_call.1} parent=5 // pred_fallthru
        _
    $region6: #{tpu_custom_call.1} parent=1 // loop_footer
      %s26 = sadd.s32 1, %s22
    $region7: #{tpu_custom_call.1} parent=1 // loop_footer_branch
      %21 = sbr.rel target = $region3
    $region8: #{tpu_custom_call.1} parent=1 // loop_exit
      _
    %532 = vsyncpa [#allocation3], 1
    %s533 = scalar_lea.sflag [#allocation3], 1
    %534 = vsyncpa %s533, 1
    %535 = vsyncpa [#allocation6], 1
    %536 = vsyncpa [#allocation4], 1
    %s537 = scalar_lea.sflag [#allocation4], 1
    %538 = vsyncpa %s537, 1
    %539 = vsyncpa [#allocation10], 1
    %s540 = scalar_lea.sflag [#allocation10], 1
    %541 = vsyncpa %s540, 1

</llo_original>
